<compile_context>
chip_gen: v6e
topology: v6e:2x2x1
jax: 0.10.0
libtpu: 0.0.40
codegen_flags: <defaults>
</compile_context>

<pallas_src>
import jax
import jax.numpy as jnp
from jax import lax
from jax.experimental import pallas as pl
from jax.experimental.pallas import tpu as pltpu

_DROPOUT_P = 0.1
# keep iff hash_u32 < (1 - p) * 2^32  (unsigned integer-space compare)
_KEEP_THRESHOLD_U32 = int((1.0 - _DROPOUT_P) * float(1 << 32))  # 3865470566
_SCALE = 1.0 / (1.0 - _DROPOUT_P)


def _softmax_dropout_kernel(seed_ref, x_ref, drop_ref, mask_ref, sm_ref):
    """One row tile: softmax(-1) + dropout(p=0.1); emits (dropped, mask_i8, softmax)."""
    tile = pl.program_id(0)
    tile_rows, n = sm_ref.shape

    x = x_ref[...].astype(jnp.float32)

    # --- numerically stable softmax over the last (lane) axis ---
    row_max = jnp.max(x, axis=-1, keepdims=True)
    e = jnp.exp(x - row_max)
    denom = jnp.sum(e, axis=-1, keepdims=True)
    sm = e * pl.reciprocal(denom, approx=True)  # EUP vrcp; VPU slot stays free

    # --- stateless counter-hash PRNG (portable: plain VPU integer ops) ---
    # unique 32-bit counter per element of the full (rows, n) slab
    row = lax.broadcasted_iota(jnp.int32, (tile_rows, n), 0)
    col = lax.broadcasted_iota(jnp.int32, (tile_rows, n), 1)
    flat = (tile * tile_rows + row) * n + col  # wraps mod 2^32 -> still unique
    h = flat.astype(jnp.uint32)
    h = h ^ (seed_ref[0].astype(jnp.uint32) * jnp.uint32(0x9E3779B9))
    # lowbias32 finalizer
    h = h ^ (h >> 16)
    h = h * jnp.uint32(0x7FEB352D)
    h = h ^ (h >> 15)
    h = h * jnp.uint32(0x846CA68B)
    h = h ^ (h >> 16)
    keep = h < jnp.uint32(_KEEP_THRESHOLD_U32)  # bool, P(keep) = 1 - p

    dropped = jnp.where(keep, sm * jnp.float32(_SCALE), 0.0)

    sm_ref[...] = sm.astype(sm_ref.dtype)
    drop_ref[...] = dropped.astype(drop_ref.dtype)
    mask_ref[...] = keep.astype(jnp.int8)  # 1-byte mask write


@jax.jit
def softmax_dropout_forward(x, seed):
    """Mirrors SoftmaxForward.forward: returns (dropout_output, mask, softmax_output)."""
    orig_shape = x.shape
    n = orig_shape[-1]
    rows = x.size // n
    x2 = x.reshape(rows, n)

    # Adaptive row tiling: ~4 MiB per block position across 1 input + 3 outputs
    # (pipeline double-buffers -> ~8 MiB), comfortably inside the 32 MiB scoped
    # VMEM budget on v5e/v6e and on v7x's smaller 64 MiB physical VMEM, while
    # being large enough (>=512 rows for n <= ~2k) to sit near the HBM roofline.
    itemsize = jnp.dtype(x.dtype).itemsize
    bytes_per_row = n * (3 * itemsize + 1)  # x + dropped + softmax (+ int8 mask)
    budget_rows = max(8, ((4 * 1024 * 1024) // max(bytes_per_row, 1)) // 8 * 8)
    tile_rows = rows if rows <= budget_rows else budget_rows

    grid = (pl.cdiv(rows, tile_rows),)
    seed_arr = jnp.asarray([seed], dtype=jnp.int32)

    # TODO(synk): for n < 128 the last dim is lane-sparse (masked vst on n/128
    # lanes); a lane-dense folded layout (groups of 128//n rows packed into the
    # lane axis with a segmented softmax) would help further, but needs an
    # in-kernel lane-splitting reshape that Mosaic does not reliably support.
    blk = pl.BlockSpec((tile_rows, n), lambda i, seed_ref: (i, 0))

    drop2, mask2, sm2 = pl.pallas_call(
        _softmax_dropout_kernel,
        out_shape=(
            jax.ShapeDtypeStruct((rows, n), x.dtype),   # dropout output
            jax.ShapeDtypeStruct((rows, n), jnp.int8),  # keep mask (1 byte/elem)
            jax.ShapeDtypeStruct((rows, n), x.dtype),   # softmax output
        ),
        grid_spec=pltpu.PrefetchScalarGridSpec(
            num_scalar_prefetch=1,
            grid=grid,
            in_specs=[blk],
            out_specs=[blk, blk, blk],
        ),
        compiler_params=pltpu.CompilerParams(
            # Row tiles are fully independent (stateless hash PRNG), so Mosaic
            # may shard them across both TensorCores on v7x.
            dimension_semantics=("parallel",),
            vmem_limit_bytes=32 * 1024 * 1024,
        ),
    )(seed_arr, x2)

    dropout_output = drop2.reshape(orig_shape)
    # native_dropout returns a bool mask; int8 -> bool is a cheap 1B->1B pass
    # (the expensive f32 mask write + convert is gone).
    mask = mask2.reshape(orig_shape).astype(jnp.bool_)
    softmax_output = sm2.reshape(orig_shape)
    return dropout_output, mask, softmax_output


if __name__ == "__main__":
    key = jax.random.PRNGKey(0)
    # Attention-score-like input: [batch=2, heads=4, seq=16, seq=16]
    x = jax.random.normal(key, (2, 4, 16, 16), dtype=jnp.float32)

    drop_out, mask, sm_out = softmax_dropout_forward(x, 0)
    jax.block_until_ready((drop_out, mask, sm_out))

    # light sanity checks
    assert drop_out.shape == x.shape and sm_out.shape == x.shape
    assert mask.shape == x.shape and mask.dtype == jnp.bool_

    ref_sm = jax.nn.softmax(x, axis=-1)
    # approx reciprocal -> allow ~1e-3 absolute error on softmax values
    assert jnp.allclose(sm_out, ref_sm, atol=2e-3, rtol=2e-3), "softmax mismatch"

    recon = sm_out * mask.astype(jnp.float32) * jnp.float32(_SCALE)
    assert jnp.allclose(drop_out, recon, atol=1e-5), "dropout semantics mismatch"

    keep_rate = float(jnp.mean(mask.astype(jnp.float32)))
    assert 0.84 < keep_rate < 0.96, f"keep rate off: {keep_rate}"

    print("KERNEL_OK")
</pallas_src>

<mosaic_0001>
module attributes {stable_mosaic.version = 11 : i64} {
  func.func @_softmax_dropout_kernel(%arg0: i32, %arg1: memref<1xi32, #tpu.memory_space<smem>>, %arg2: memref<128x16xf32, #tpu.memory_space<vmem>>, %arg3: memref<128x16xf32, #tpu.memory_space<vmem>>, %arg4: memref<128x16xi8, #tpu.memory_space<vmem>>, %arg5: memref<128x16xf32, #tpu.memory_space<vmem>>) attributes {dimension_semantics = [#tpu.dimension_semantics<parallel>], iteration_bounds = array<i64: 1>, scalar_prefetch = 1 : i64, scratch_operands = 0 : i64, tpu.core_type = #tpu.core_type<tc>, window_params = [{transform_indices = @transform_0, window_bounds = array<i64: 128, 16>}, {transform_indices = @transform_1, window_bounds = array<i64: 128, 16>}, {transform_indices = @transform_2, window_bounds = array<i64: 128, 16>}, {transform_indices = @transform_3, window_bounds = array<i64: 128, 16>}]} {
    %c0 = arith.constant 0 : index
    %c0_0 = arith.constant 0 : index
    %0 = vector.load %arg2[%c0, %c0_0] : memref<128x16xf32, #tpu.memory_space<vmem>>, vector<128x16xf32>
    %cst = arith.constant dense<0xFF800000> : vector<128xf32>
    %1 = vector.multi_reduction <maximumf>, %0, %cst [1] : vector<128x16xf32> to vector<128xf32>
    %2 = vector.shape_cast %1 : vector<128xf32> to vector<128x1xf32>
    %3 = vector.broadcast %2 : vector<128x1xf32> to vector<128x16xf32>
    %4 = arith.subf %0, %3 : vector<128x16xf32>
    %5 = math.exp %4 : vector<128x16xf32>
    %cst_1 = arith.constant dense<0.000000e+00> : vector<128xf32>
    %6 = vector.multi_reduction <add>, %5, %cst_1 [1] : vector<128x16xf32> to vector<128xf32>
    %7 = vector.shape_cast %6 : vector<128xf32> to vector<128x1xf32>
    %8 = tpu.reciprocal %7 {approx = true} : vector<128x1xf32> -> vector<128x1xf32>
    %9 = vector.broadcast %8 : vector<128x1xf32> to vector<128x16xf32>
    %10 = arith.mulf %5, %9 : vector<128x16xf32>
    %11 = tpu.iota {dimensions = array<i32: 0>} : vector<128x16xi32>
    %12 = tpu.iota {dimensions = array<i32: 1>} : vector<128x16xi32>
    %c128_i32 = arith.constant 128 : i32
    %13 = arith.muli %arg0, %c128_i32 : i32
    %14 = vector.broadcast %13 : i32 to vector<128x16xi32>
    %15 = arith.addi %14, %11 : vector<128x16xi32>
    %c16_i32 = arith.constant 16 : i32
    %16 = vector.broadcast %c16_i32 : i32 to vector<128x16xi32>
    %17 = arith.muli %15, %16 : vector<128x16xi32>
    %18 = arith.addi %17, %12 : vector<128x16xi32>
    %c0_2 = arith.constant 0 : index
    %19 = memref.load %arg1[%c0_2] : memref<1xi32, #tpu.memory_space<smem>>
    %c-1640531527_i32 = arith.constant -1640531527 : i32
    %20 = arith.muli %19, %c-1640531527_i32 : i32
    %21 = vector.broadcast %20 : i32 to vector<128x16xi32>
    %22 = arith.xori %18, %21 : vector<128x16xi32>
    %c16_i32_3 = arith.constant 16 : i32
    %23 = vector.broadcast %c16_i32_3 : i32 to vector<128x16xi32>
    %24 = arith.shrui %22, %23 : vector<128x16xi32>
    %25 = arith.xori %22, %24 : vector<128x16xi32>
    %c2146121005_i32 = arith.constant 2146121005 : i32
    %26 = vector.broadcast %c2146121005_i32 : i32 to vector<128x16xi32>
    %27 = arith.muli %25, %26 : vector<128x16xi32>
    %c15_i32 = arith.constant 15 : i32
    %28 = vector.broadcast %c15_i32 : i32 to vector<128x16xi32>
    %29 = arith.shrui %27, %28 : vector<128x16xi32>
    %30 = arith.xori %27, %29 : vector<128x16xi32>
    %c-2073254261_i32 = arith.constant -2073254261 : i32
    %31 = vector.broadcast %c-2073254261_i32 : i32 to vector<128x16xi32>
    %32 = arith.muli %30, %31 : vector<128x16xi32>
    %c16_i32_4 = arith.constant 16 : i32
    %33 = vector.broadcast %c16_i32_4 : i32 to vector<128x16xi32>
    %34 = arith.shrui %32, %33 : vector<128x16xi32>
    %35 = arith.xori %32, %34 : vector<128x16xi32>
    %c-429496730_i32 = arith.constant -429496730 : i32
    %36 = vector.broadcast %c-429496730_i32 : i32 to vector<128x16xi32>
    %37 = arith.cmpi ult, %35, %36 : vector<128x16xi32>
    %cst_5 = arith.constant 1.11111116 : f32
    %38 = vector.broadcast %cst_5 : f32 to vector<128x16xf32>
    %39 = arith.mulf %10, %38 : vector<128x16xf32>
    %cst_6 = arith.constant 0.000000e+00 : f32
    %40 = vector.broadcast %cst_6 : f32 to vector<128x16xf32>
    %41 = arith.select %37, %39, %40 : vector<128x16xi1>, vector<128x16xf32>
    %c0_7 = arith.constant 0 : index
    %c0_8 = arith.constant 0 : index
    %42 = vector.load %arg5[%c0_7, %c0_8] : memref<128x16xf32, #tpu.memory_space<vmem>>, vector<128x16xf32>
    tpu.vector_store %arg5[%c0_7, %c0_8], %10 {strides = array<i32>} : memref<128x16xf32, #tpu.memory_space<vmem>>, vector<128x16xf32>,
    %c0_9 = arith.constant 0 : index
    %c0_10 = arith.constant 0 : index
    %43 = vector.load %arg3[%c0_9, %c0_10] : memref<128x16xf32, #tpu.memory_space<vmem>>, vector<128x16xf32>
    tpu.vector_store %arg3[%c0_9, %c0_10], %41 {strides = array<i32>} : memref<128x16xf32, #tpu.memory_space<vmem>>, vector<128x16xf32>,
    %44 = arith.extui %37 : vector<128x16xi1> to vector<128x16xi8>
    %c0_11 = arith.constant 0 : index
    %c0_12 = arith.constant 0 : index
    %45 = vector.load %arg4[%c0_11, %c0_12] : memref<128x16xi8, #tpu.memory_space<vmem>>, vector<128x16xi8>
    tpu.vector_store %arg4[%c0_11, %c0_12], %44 {strides = array<i32>} : memref<128x16xi8, #tpu.memory_space<vmem>>, vector<128x16xi8>,
    return
  }
  func.func @transform_0(%arg0: i32, %arg1: memref<1xi32, #tpu.memory_space<smem>>) -> (i32, i32) {
    %c0_i32 = arith.constant 0 : i32
    %c0_i32_0 = arith.constant 0 : i32
    return %arg0, %c0_i32 : i32, i32
  }
  func.func @transform_1(%arg0: i32, %arg1: memref<1xi32, #tpu.memory_space<smem>>) -> (i32, i32) {
    %c0_i32 = arith.constant 0 : i32
    %c0_i32_0 = arith.constant 0 : i32
    return %arg0, %c0_i32 : i32, i32
  }
  func.func @transform_2(%arg0: i32, %arg1: memref<1xi32, #tpu.memory_space<smem>>) -> (i32, i32) {
    %c0_i32 = arith.constant 0 : i32
    %c0_i32_0 = arith.constant 0 : i32
    return %arg0, %c0_i32 : i32, i32
  }
  func.func @transform_3(%arg0: i32, %arg1: memref<1xi32, #tpu.memory_space<smem>>) -> (i32, i32) {
    %c0_i32 = arith.constant 0 : i32
    %c0_i32_0 = arith.constant 0 : i32
    return %arg0, %c0_i32 : i32, i32
  }
}

</mosaic_0001>

<llo_original>
// kernel: softmax_dropout_forward.1
$region0: #{softmax_dropout_forward.1}
  #allocation0 [shape = 'u32[]', space=smem, size = 0x4, offset = 0x4, fixed_abs, tag = 'smem constant byte address 0x4 - core index']
  #allocation1 [shape = 'u32[144,128]{1,0:T(1,128)}', space=vmem, size = 0x12000, scoped, tag = 'internal scratch']
  #allocation2 [shape = 's32[1]{0}', space=sflag, size = 0x4, scoped, tag = 'scoped memory for softmax_dropout_forward.1']
  #allocation3 [shape = 's32[1]{0:T(128)S(6)}', space=smem, size = 0x200, scoped, tag = 'prefetched SMEM operand 0']
  %s0 = inlined_call_operand.<no memory space> [shape: s32[1], index: 0, kind: input, shape index: {}]
  %s1 = inlined_call_operand.hbm [shape: f32[128,16], index: 1, kind: input, shape index: {}]
  %s2 = inlined_call_operand.hbm [shape: f32[128,16], index: 2, kind: output, shape index: {0}]
  %s3 = inlined_call_operand.vmem [shape: s8[128,16], index: 3, kind: output, shape index: {1}]
  %s4 = inlined_call_operand.hbm [shape: f32[128,16], index: 4, kind: output, shape index: {2}]
  %5 = xla_tuple %s2, %s3, %s4
  %s6 = sld [smem:[#allocation0]]
  $region34: #{softmax_dropout_forward.1} parent=0
    _
  %s8 = ssub.s32 1, %s6
  %s9 = scalar_select 0, %s8, %s6
  %10 = sst [smem:[#allocation3]] %s0
  $region1: #{softmax_dropout_forward.1} parent=0
    #allocation4 [shape = 'u8[65536]{0}', space=vmem, size = 0x10000, scoped, tag = 'input window, operand 1, single buffered']
    #allocation5 [shape = 's32[1]{0}', space=sflag, size = 0x4, scoped, tag = 'scoped memory for softmax_dropout_forward.1']
    #allocation6 [shape = 's32[1]{0}', space=sflag, size = 0x4, scoped, tag = 'scoped memory for softmax_dropout_forward.1']
    #allocation7 [shape = 'u8[65536]{0}', space=vmem, size = 0x10000, scoped, tag = 'output window, operand 0, single buffered']
    #allocation8 [shape = 'u8[65536]{0}', space=vmem, size = 0x10000, scoped, tag = 'output window, operand 2, single buffered']
    #allocation9 [shape = 's32[1]{0}', space=sflag, size = 0x4, scoped, tag = 'scoped memory for softmax_dropout_forward.1']
    %11 = vsyncpa [#allocation5], 0
    %12 = vsyncpa [#allocation6], 0
    %13 = vsyncpa [#allocation9], 0
    // Predicated region
    $region2: #{softmax_dropout_forward.1} parent=1 // pred_check
      _
    $region3: #{softmax_dropout_forward.1} parent=1 // pred_check_branch
      %15 = sbr.rel (0) target = $region5
    $region4: #{softmax_dropout_forward.1} parent=1 // pred_region
      %s17 = ssub.s32 2048, 2048
      %18 = vsyncadd [#allocation5], %s17
      %s19 = sshll.u32 [#allocation4], 4
      %s20 = int_to_ptr.vmem [resolvable:$true] %s19
      %25 = dma.hbm_to_vmem [thread:$0]  %s1, 2048, %s20, [#allocation5], 128, 128, 8
    $region5: #{softmax_dropout_forward.1} parent=1 // pred_fallthru
      _
    // Predicated region
    $region6: #{softmax_dropout_forward.1} parent=1 // pred_check
      _
    $region7: #{softmax_dropout_forward.1} parent=1 // pred_check_branch
      %27 = sbr.rel (0) target = $region9
    $region8: #{softmax_dropout_forward.1} parent=1 // pred_region
      %28 = dma.done [#allocation5], 2048
    $region9: #{softmax_dropout_forward.1} parent=1 // pred_fallthru
      _
    %v31 = vld [vmem:[#allocation4] sm:$0xff]
    %v32 = vld [vmem:[#allocation4 + $0x8] sm:$0xff]
    %v33 = vld [vmem:[#allocation4 + $0x10] sm:$0xff]
    %v34 = vld [vmem:[#allocation4 + $0x18] sm:$0xff]
    %v35 = vld [vmem:[#allocation4 + $0x20] sm:$0xff]
    %v36 = vld [vmem:[#allocation4 + $0x28] sm:$0xff]
    %v37 = vld [vmem:[#allocation4 + $0x30] sm:$0xff]
    %v38 = vld [vmem:[#allocation4 + $0x38] sm:$0xff]
    %v39 = vld [vmem:[#allocation4 + $0x40] sm:$0xff]
    %v40 = vld [vmem:[#allocation4 + $0x48] sm:$0xff]
    %v41 = vld [vmem:[#allocation4 + $0x50] sm:$0xff]
    %v42 = vld [vmem:[#allocation4 + $0x58] sm:$0xff]
    %v43 = vld [vmem:[#allocation4 + $0x60] sm:$0xff]
    %v44 = vld [vmem:[#allocation4 + $0x68] sm:$0xff]
    %v45 = vld [vmem:[#allocation4 + $0x70] sm:$0xff]
    %v46 = vld [vmem:[#allocation4 + $0x78] sm:$0xff]
    %vm47 = vcmask 130048
    %v48 = vsel %vm47, %v31, -inf
    %49 = vmax.xlane.f32.xlu0 %v48
    %v50 = vpop.xlane.xlu0 %49
    %v51 = vsel %vm47, %v32, -inf
    %52 = vmax.xlane.f32.xlu0 %v51
    %v53 = vpop.xlane.xlu0 %52
    %v54 = vsel %vm47, %v33, -inf
    %55 = vmax.xlane.f32.xlu0 %v54
    %v56 = vpop.xlane.xlu0 %55
    %v57 = vsel %vm47, %v34, -inf
    %58 = vmax.xlane.f32.xlu0 %v57
    %v59 = vpop.xlane.xlu0 %58
    %v60 = vsel %vm47, %v35, -inf
    %61 = vmax.xlane.f32.xlu0 %v60
    %v62 = vpop.xlane.xlu0 %61
    %v63 = vsel %vm47, %v36, -inf
    %64 = vmax.xlane.f32.xlu0 %v63
    %v65 = vpop.xlane.xlu0 %64
    %v66 = vsel %vm47, %v37, -inf
    %67 = vmax.xlane.f32.xlu0 %v66
    %v68 = vpop.xlane.xlu0 %67
    %v69 = vsel %vm47, %v38, -inf
    %70 = vmax.xlane.f32.xlu0 %v69
    %v71 = vpop.xlane.xlu0 %70
    %v72 = vsel %vm47, %v39, -inf
    %73 = vmax.xlane.f32.xlu0 %v72
    %v74 = vpop.xlane.xlu0 %73
    %v75 = vsel %vm47, %v40, -inf
    %76 = vmax.xlane.f32.xlu0 %v75
    %v77 = vpop.xlane.xlu0 %76
    %v78 = vsel %vm47, %v41, -inf
    %79 = vmax.xlane.f32.xlu0 %v78
    %v80 = vpop.xlane.xlu0 %79
    %v81 = vsel %vm47, %v42, -inf
    %82 = vmax.xlane.f32.xlu0 %v81
    %v83 = vpop.xlane.xlu0 %82
    %v84 = vsel %vm47, %v43, -inf
    %85 = vmax.xlane.f32.xlu0 %v84
    %v86 = vpop.xlane.xlu0 %85
    %v87 = vsel %vm47, %v44, -inf
    %88 = vmax.xlane.f32.xlu0 %v87
    %v89 = vpop.xlane.xlu0 %88
    %v90 = vsel %vm47, %v45, -inf
    %91 = vmax.xlane.f32.xlu0 %v90
    %v92 = vpop.xlane.xlu0 %91
    %v93 = vsel %vm47, %v46, -inf
    %94 = vmax.xlane.f32.xlu0 %v93
    %v95 = vpop.xlane.xlu0 %94
    %v96 = vsub.f32 %v31, %v50
    %v97 = vsub.f32 %v32, %v53
    %v98 = vsub.f32 %v33, %v56
    %v99 = vsub.f32 %v34, %v59
    %v100 = vsub.f32 %v35, %v62
    %v101 = vsub.f32 %v36, %v65
    %v102 = vsub.f32 %v37, %v68
    %v103 = vsub.f32 %v38, %v71
    %v104 = vsub.f32 %v39, %v74
    %v105 = vsub.f32 %v40, %v77
    %v106 = vsub.f32 %v41, %v80
    %v107 = vsub.f32 %v42, %v83
    %v108 = vsub.f32 %v43, %v86
    %v109 = vsub.f32 %v44, %v89
    %v110 = vsub.f32 %v45, %v92
    %v111 = vsub.f32 %v46, %v95
    %v112 = vmul.f32 %v96, 1.442695
    %v113 = vpow.pop %v112
    %v114 = vmul.f32 %v97, 1.442695
    %v115 = vpow.pop %v114
    %v116 = vmul.f32 %v98, 1.442695
    %v117 = vpow.pop %v116
    %v118 = vmul.f32 %v99, 1.442695
    %v119 = vpow.pop %v118
    %v120 = vmul.f32 %v100, 1.442695
    %v121 = vpow.pop %v120
    %v122 = vmul.f32 %v101, 1.442695
    %v123 = vpow.pop %v122
    %v124 = vmul.f32 %v102, 1.442695
    %v125 = vpow.pop %v124
    %v126 = vmul.f32 %v103, 1.442695
    %v127 = vpow.pop %v126
    %v128 = vmul.f32 %v104, 1.442695
    %v129 = vpow.pop %v128
    %v130 = vmul.f32 %v105, 1.442695
    %v131 = vpow.pop %v130
    %v132 = vmul.f32 %v106, 1.442695
    %v133 = vpow.pop %v132
    %v134 = vmul.f32 %v107, 1.442695
    %v135 = vpow.pop %v134
    %v136 = vmul.f32 %v108, 1.442695
    %v137 = vpow.pop %v136
    %v138 = vmul.f32 %v109, 1.442695
    %v139 = vpow.pop %v138
    %v140 = vmul.f32 %v110, 1.442695
    %v141 = vpow.pop %v140
    %v142 = vmul.f32 %v111, 1.442695
    %v143 = vpow.pop %v142
    %v144 = vsel %vm47, %v113, 0.0
    %145 = vadd.xlane.f32.xlu0 %v144
    %v146 = vpop.xlane.xlu0 %145
    %v147 = vsel %vm47, %v115, 0.0
    %148 = vadd.xlane.f32.xlu0 %v147
    %v149 = vpop.xlane.xlu0 %148
    %v150 = vsel %vm47, %v117, 0.0
    %151 = vadd.xlane.f32.xlu0 %v150
    %v152 = vpop.xlane.xlu0 %151
    %v153 = vsel %vm47, %v119, 0.0
    %154 = vadd.xlane.f32.xlu0 %v153
    %v155 = vpop.xlane.xlu0 %154
    %v156 = vsel %vm47, %v121, 0.0
    %157 = vadd.xlane.f32.xlu0 %v156
    %v158 = vpop.xlane.xlu0 %157
    %v159 = vsel %vm47, %v123, 0.0
    %160 = vadd.xlane.f32.xlu0 %v159
    %v161 = vpop.xlane.xlu0 %160
    %v162 = vsel %vm47, %v125, 0.0
    %163 = vadd.xlane.f32.xlu0 %v162
    %v164 = vpop.xlane.xlu0 %163
    %v165 = vsel %vm47, %v127, 0.0
    %166 = vadd.xlane.f32.xlu0 %v165
    %v167 = vpop.xlane.xlu0 %166
    %v168 = vsel %vm47, %v129, 0.0
    %169 = vadd.xlane.f32.xlu0 %v168
    %v170 = vpop.xlane.xlu0 %169
    %v171 = vsel %vm47, %v131, 0.0
    %172 = vadd.xlane.f32.xlu0 %v171
    %v173 = vpop.xlane.xlu0 %172
    %v174 = vsel %vm47, %v133, 0.0
    %175 = vadd.xlane.f32.xlu0 %v174
    %v176 = vpop.xlane.xlu0 %175
    %v177 = vsel %vm47, %v135, 0.0
    %178 = vadd.xlane.f32.xlu0 %v177
    %v179 = vpop.xlane.xlu0 %178
    %v180 = vsel %vm47, %v137, 0.0
    %181 = vadd.xlane.f32.xlu0 %v180
    %v182 = vpop.xlane.xlu0 %181
    %v183 = vsel %vm47, %v139, 0.0
    %184 = vadd.xlane.f32.xlu0 %v183
    %v185 = vpop.xlane.xlu0 %184
    %v186 = vsel %vm47, %v141, 0.0
    %187 = vadd.xlane.f32.xlu0 %v186
    %v188 = vpop.xlane.xlu0 %187
    %v189 = vsel %vm47, %v143, 0.0
    %190 = vadd.xlane.f32.xlu0 %v189
    %v191 = vpop.xlane.xlu0 %190
    %v192 = vrcp.pop %v146
    %v193 = vrcp.pop %v149
    %v194 = vrcp.pop %v152
    %v195 = vrcp.pop %v155
    %v196 = vrcp.pop %v158
    %v197 = vrcp.pop %v161
    %v198 = vrcp.pop %v164
    %v199 = vrcp.pop %v167
    %v200 = vrcp.pop %v170
    %v201 = vrcp.pop %v173
    %v202 = vrcp.pop %v176
    %v203 = vrcp.pop %v179
    %v204 = vrcp.pop %v182
    %v205 = vrcp.pop %v185
    %v206 = vrcp.pop %v188
    %v207 = vrcp.pop %v191
    %v208 = vmul.f32 %v113, %v192
    %v209 = vmul.f32 %v115, %v193
    %v210 = vmul.f32 %v117, %v194
    %v211 = vmul.f32 %v119, %v195
    %v212 = vmul.f32 %v121, %v196
    %v213 = vmul.f32 %v123, %v197
    %v214 = vmul.f32 %v125, %v198
    %v215 = vmul.f32 %v127, %v199
    %v216 = vmul.f32 %v129, %v200
    %v217 = vmul.f32 %v131, %v201
    %v218 = vmul.f32 %v133, %v202
    %v219 = vmul.f32 %v135, %v203
    %v220 = vmul.f32 %v137, %v204
    %v221 = vmul.f32 %v139, %v205
    %v222 = vmul.f32 %v141, %v206
    %v223 = vmul.f32 %v143, %v207
    %v224 = vlaneseq
    %v225 = vshrl.u32 %v224, 7
    %v226 = vadd.s32 %v225, 8
    %v227 = vadd.s32 %v225, 16
    %v228 = vadd.s32 %v225, 24
    %v229 = vadd.s32 %v225, 32
    %v230 = vadd.s32 %v225, 40
    %v231 = vadd.s32 %v225, 48
    %v232 = vadd.s32 %v225, 56
    %v233 = vadd.s32 %v225, 64
    %v234 = vadd.s32 %v225, 72
    %v235 = vadd.s32 %v225, 80
    %v236 = vadd.s32 %v225, 88
    %v237 = vadd.s32 %v225, 96
    %v238 = vadd.s32 %v225, 104
    %v239 = vadd.s32 %v225, 112
    %v240 = vadd.s32 %v225, 120
    %v241 = vlaneseq
    %v242 = vand.u32 %v241, 127
    %s243 = smul.u32 0, 128
    %v244 = vstv %s243
    %v245 = vadd.s32 %v244, %v225
    %v246 = vadd.s32 %v244, %v226
    %v247 = vadd.s32 %v244, %v227
    %v248 = vadd.s32 %v244, %v228
    %v249 = vadd.s32 %v244, %v229
    %v250 = vadd.s32 %v244, %v230
    %v251 = vadd.s32 %v244, %v231
    %v252 = vadd.s32 %v244, %v232
    %v253 = vadd.s32 %v244, %v233
    %v254 = vadd.s32 %v244, %v234
    %v255 = vadd.s32 %v244, %v235
    %v256 = vadd.s32 %v244, %v236
    %v257 = vadd.s32 %v244, %v237
    %v258 = vadd.s32 %v244, %v238
    %v259 = vadd.s32 %v244, %v239
    %v260 = vadd.s32 %v244, %v240
    %v261 = vmul.u32 %v245, 16
    %v262 = vmul.u32 %v246, 16
    %v263 = vmul.u32 %v247, 16
    %v264 = vmul.u32 %v248, 16
    %v265 = vmul.u32 %v249, 16
    %v266 = vmul.u32 %v250, 16
    %v267 = vmul.u32 %v251, 16
    %v268 = vmul.u32 %v252, 16
    %v269 = vmul.u32 %v253, 16
    %v270 = vmul.u32 %v254, 16
    %v271 = vmul.u32 %v255, 16
    %v272 = vmul.u32 %v256, 16
    %v273 = vmul.u32 %v257, 16
    %v274 = vmul.u32 %v258, 16
    %v275 = vmul.u32 %v259, 16
    %v276 = vmul.u32 %v260, 16
    %v277 = vadd.s32 %v261, %v242
    %v278 = vadd.s32 %v262, %v242
    %v279 = vadd.s32 %v263, %v242
    %v280 = vadd.s32 %v264, %v242
    %v281 = vadd.s32 %v265, %v242
    %v282 = vadd.s32 %v266, %v242
    %v283 = vadd.s32 %v267, %v242
    %v284 = vadd.s32 %v268, %v242
    %v285 = vadd.s32 %v269, %v242
    %v286 = vadd.s32 %v270, %v242
    %v287 = vadd.s32 %v271, %v242
    %v288 = vadd.s32 %v272, %v242
    %v289 = vadd.s32 %v273, %v242
    %v290 = vadd.s32 %v274, %v242
    %v291 = vadd.s32 %v275, %v242
    %v292 = vadd.s32 %v276, %v242
    %s293 = sld [smem:[#allocation3]]
    %s294 = smul.u32 %s293, 2654435769
    %v295 = vstv %s294
    %v296 = vxor.u32 %v277, %v295
    %v297 = vxor.u32 %v278, %v295
    %v298 = vxor.u32 %v279, %v295
    %v299 = vxor.u32 %v280, %v295
    %v300 = vxor.u32 %v281, %v295
    %v301 = vxor.u32 %v282, %v295
    %v302 = vxor.u32 %v283, %v295
    %v303 = vxor.u32 %v284, %v295
    %v304 = vxor.u32 %v285, %v295
    %v305 = vxor.u32 %v286, %v295
    %v306 = vxor.u32 %v287, %v295
    %v307 = vxor.u32 %v288, %v295
    %v308 = vxor.u32 %v289, %v295
    %v309 = vxor.u32 %v290, %v295
    %v310 = vxor.u32 %v291, %v295
    %v311 = vxor.u32 %v292, %v295
    %v312 = vshrl.u32 %v296, 16
    %v313 = vshrl.u32 %v297, 16
    %v314 = vshrl.u32 %v298, 16
    %v315 = vshrl.u32 %v299, 16
    %v316 = vshrl.u32 %v300, 16
    %v317 = vshrl.u32 %v301, 16
    %v318 = vshrl.u32 %v302, 16
    %v319 = vshrl.u32 %v303, 16
    %v320 = vshrl.u32 %v304, 16
    %v321 = vshrl.u32 %v305, 16
    %v322 = vshrl.u32 %v306, 16
    %v323 = vshrl.u32 %v307, 16
    %v324 = vshrl.u32 %v308, 16
    %v325 = vshrl.u32 %v309, 16
    %v326 = vshrl.u32 %v310, 16
    %v327 = vshrl.u32 %v311, 16
    %v328 = vxor.u32 %v296, %v312
    %v329 = vxor.u32 %v297, %v313
    %v330 = vxor.u32 %v298, %v314
    %v331 = vxor.u32 %v299, %v315
    %v332 = vxor.u32 %v300, %v316
    %v333 = vxor.u32 %v301, %v317
    %v334 = vxor.u32 %v302, %v318
    %v335 = vxor.u32 %v303, %v319
    %v336 = vxor.u32 %v304, %v320
    %v337 = vxor.u32 %v305, %v321
    %v338 = vxor.u32 %v306, %v322
    %v339 = vxor.u32 %v307, %v323
    %v340 = vxor.u32 %v308, %v324
    %v341 = vxor.u32 %v309, %v325
    %v342 = vxor.u32 %v310, %v326
    %v343 = vxor.u32 %v311, %v327
    %v344 = vmul.u32 %v328, 2146121005
    %v345 = vmul.u32 %v329, 2146121005
    %v346 = vmul.u32 %v330, 2146121005
    %v347 = vmul.u32 %v331, 2146121005
    %v348 = vmul.u32 %v332, 2146121005
    %v349 = vmul.u32 %v333, 2146121005
    %v350 = vmul.u32 %v334, 2146121005
    %v351 = vmul.u32 %v335, 2146121005
    %v352 = vmul.u32 %v336, 2146121005
    %v353 = vmul.u32 %v337, 2146121005
    %v354 = vmul.u32 %v338, 2146121005
    %v355 = vmul.u32 %v339, 2146121005
    %v356 = vmul.u32 %v340, 2146121005
    %v357 = vmul.u32 %v341, 2146121005
    %v358 = vmul.u32 %v342, 2146121005
    %v359 = vmul.u32 %v343, 2146121005
    %v360 = vshrl.u32 %v344, 15
    %v361 = vshrl.u32 %v345, 15
    %v362 = vshrl.u32 %v346, 15
    %v363 = vshrl.u32 %v347, 15
    %v364 = vshrl.u32 %v348, 15
    %v365 = vshrl.u32 %v349, 15
    %v366 = vshrl.u32 %v350, 15
    %v367 = vshrl.u32 %v351, 15
    %v368 = vshrl.u32 %v352, 15
    %v369 = vshrl.u32 %v353, 15
    %v370 = vshrl.u32 %v354, 15
    %v371 = vshrl.u32 %v355, 15
    %v372 = vshrl.u32 %v356, 15
    %v373 = vshrl.u32 %v357, 15
    %v374 = vshrl.u32 %v358, 15
    %v375 = vshrl.u32 %v359, 15
    %v376 = vxor.u32 %v344, %v360
    %v377 = vxor.u32 %v345, %v361
    %v378 = vxor.u32 %v346, %v362
    %v379 = vxor.u32 %v347, %v363
    %v380 = vxor.u32 %v348, %v364
    %v381 = vxor.u32 %v349, %v365
    %v382 = vxor.u32 %v350, %v366
    %v383 = vxor.u32 %v351, %v367
    %v384 = vxor.u32 %v352, %v368
    %v385 = vxor.u32 %v353, %v369
    %v386 = vxor.u32 %v354, %v370
    %v387 = vxor.u32 %v355, %v371
    %v388 = vxor.u32 %v356, %v372
    %v389 = vxor.u32 %v357, %v373
    %v390 = vxor.u32 %v358, %v374
    %v391 = vxor.u32 %v359, %v375
    %v392 = vmul.u32 %v376, 2221713035
    %v393 = vmul.u32 %v377, 2221713035
    %v394 = vmul.u32 %v378, 2221713035
    %v395 = vmul.u32 %v379, 2221713035
    %v396 = vmul.u32 %v380, 2221713035
    %v397 = vmul.u32 %v381, 2221713035
    %v398 = vmul.u32 %v382, 2221713035
    %v399 = vmul.u32 %v383, 2221713035
    %v400 = vmul.u32 %v384, 2221713035
    %v401 = vmul.u32 %v385, 2221713035
    %v402 = vmul.u32 %v386, 2221713035
    %v403 = vmul.u32 %v387, 2221713035
    %v404 = vmul.u32 %v388, 2221713035
    %v405 = vmul.u32 %v389, 2221713035
    %v406 = vmul.u32 %v390, 2221713035
    %v407 = vmul.u32 %v391, 2221713035
    %v408 = vshrl.u32 %v392, 16
    %v409 = vshrl.u32 %v393, 16
    %v410 = vshrl.u32 %v394, 16
    %v411 = vshrl.u32 %v395, 16
    %v412 = vshrl.u32 %v396, 16
    %v413 = vshrl.u32 %v397, 16
    %v414 = vshrl.u32 %v398, 16
    %v415 = vshrl.u32 %v399, 16
    %v416 = vshrl.u32 %v400, 16
    %v417 = vshrl.u32 %v401, 16
    %v418 = vshrl.u32 %v402, 16
    %v419 = vshrl.u32 %v403, 16
    %v420 = vshrl.u32 %v404, 16
    %v421 = vshrl.u32 %v405, 16
    %v422 = vshrl.u32 %v406, 16
    %v423 = vshrl.u32 %v407, 16
    %v424 = vxor.u32 %v392, %v408
    %v425 = vxor.u32 %v393, %v409
    %v426 = vxor.u32 %v394, %v410
    %v427 = vxor.u32 %v395, %v411
    %v428 = vxor.u32 %v396, %v412
    %v429 = vxor.u32 %v397, %v413
    %v430 = vxor.u32 %v398, %v414
    %v431 = vxor.u32 %v399, %v415
    %v432 = vxor.u32 %v400, %v416
    %v433 = vxor.u32 %v401, %v417
    %v434 = vxor.u32 %v402, %v418
    %v435 = vxor.u32 %v403, %v419
    %v436 = vxor.u32 %v404, %v420
    %v437 = vxor.u32 %v405, %v421
    %v438 = vxor.u32 %v406, %v422
    %v439 = vxor.u32 %v407, %v423
    %vm440 = vcmp.lt.u32.totalorder %v424, 3865470566
    %vm441 = vcmp.lt.u32.totalorder %v425, 3865470566
    %vm442 = vcmp.lt.u32.totalorder %v426, 3865470566
    %vm443 = vcmp.lt.u32.totalorder %v427, 3865470566
    %vm444 = vcmp.lt.u32.totalorder %v428, 3865470566
    %vm445 = vcmp.lt.u32.totalorder %v429, 3865470566
    %vm446 = vcmp.lt.u32.totalorder %v430, 3865470566
    %vm447 = vcmp.lt.u32.totalorder %v431, 3865470566
    %vm448 = vcmp.lt.u32.totalorder %v432, 3865470566
    %vm449 = vcmp.lt.u32.totalorder %v433, 3865470566
    %vm450 = vcmp.lt.u32.totalorder %v434, 3865470566
    %vm451 = vcmp.lt.u32.totalorder %v435, 3865470566
    %vm452 = vcmp.lt.u32.totalorder %v436, 3865470566
    %vm453 = vcmp.lt.u32.totalorder %v437, 3865470566
    %vm454 = vcmp.lt.u32.totalorder %v438, 3865470566
    %vm455 = vcmp.lt.u32.totalorder %v439, 3865470566
    %v456 = vmul.f32 %v208, 1.1111112
    %v457 = vmul.f32 %v209, 1.1111112
    %v458 = vmul.f32 %v210, 1.1111112
    %v459 = vmul.f32 %v211, 1.1111112
    %v460 = vmul.f32 %v212, 1.1111112
    %v461 = vmul.f32 %v213, 1.1111112
    %v462 = vmul.f32 %v214, 1.1111112
    %v463 = vmul.f32 %v215, 1.1111112
    %v464 = vmul.f32 %v216, 1.1111112
    %v465 = vmul.f32 %v217, 1.1111112
    %v466 = vmul.f32 %v218, 1.1111112
    %v467 = vmul.f32 %v219, 1.1111112
    %v468 = vmul.f32 %v220, 1.1111112
    %v469 = vmul.f32 %v221, 1.1111112
    %v470 = vmul.f32 %v222, 1.1111112
    %v471 = vmul.f32 %v223, 1.1111112
    %v472 = vsel %vm440, %v456, 0.0
    %v473 = vsel %vm441, %v457, 0.0
    %v474 = vsel %vm442, %v458, 0.0
    %v475 = vsel %vm443, %v459, 0.0
    %v476 = vsel %vm444, %v460, 0.0
    %v477 = vsel %vm445, %v461, 0.0
    %v478 = vsel %vm446, %v462, 0.0
    %v479 = vsel %vm447, %v463, 0.0
    %v480 = vsel %vm448, %v464, 0.0
    %v481 = vsel %vm449, %v465, 0.0
    %v482 = vsel %vm450, %v466, 0.0
    %v483 = vsel %vm451, %v467, 0.0
    %v484 = vsel %vm452, %v468, 0.0
    %v485 = vsel %vm453, %v469, 0.0
    %v486 = vsel %vm454, %v470, 0.0
    %v487 = vsel %vm455, %v471, 0.0
    %488 = vst.msk [vmem:[#allocation8] sm:$0xff] %vm47, %v208
    %489 = vst.msk [vmem:[#allocation8 + $0x8] sm:$0xff] %vm47, %v209
    %490 = vst.msk [vmem:[#allocation8 + $0x10] sm:$0xff] %vm47, %v210
    %491 = vst.msk [vmem:[#allocation8 + $0x18] sm:$0xff] %vm47, %v211
    %492 = vst.msk [vmem:[#allocation8 + $0x20] sm:$0xff] %vm47, %v212
    %493 = vst.msk [vmem:[#allocation8 + $0x28] sm:$0xff] %vm47, %v213
    %494 = vst.msk [vmem:[#allocation8 + $0x30] sm:$0xff] %vm47, %v214
    %495 = vst.msk [vmem:[#allocation8 + $0x38] sm:$0xff] %vm47, %v215
    %496 = vst.msk [vmem:[#allocation8 + $0x40] sm:$0xff] %vm47, %v216
    %497 = vst.msk [vmem:[#allocation8 + $0x48] sm:$0xff] %vm47, %v217
    %498 = vst.msk [vmem:[#allocation8 + $0x50] sm:$0xff] %vm47, %v218
    %499 = vst.msk [vmem:[#allocation8 + $0x58] sm:$0xff] %vm47, %v219
    %500 = vst.msk [vmem:[#allocation8 + $0x60] sm:$0xff] %vm47, %v220
    %501 = vst.msk [vmem:[#allocation8 + $0x68] sm:$0xff] %vm47, %v221
    %502 = vst.msk [vmem:[#allocation8 + $0x70] sm:$0xff] %vm47, %v222
    %503 = vst.msk [vmem:[#allocation8 + $0x78] sm:$0xff] %vm47, %v223
    %504 = vst.msk [vmem:[#allocation7] sm:$0xff] %vm47, %v472
    %505 = vst.msk [vmem:[#allocation7 + $0x8] sm:$0xff] %vm47, %v473
    %506 = vst.msk [vmem:[#allocation7 + $0x10] sm:$0xff] %vm47, %v474
    %507 = vst.msk [vmem:[#allocation7 + $0x18] sm:$0xff] %vm47, %v475
    %508 = vst.msk [vmem:[#allocation7 + $0x20] sm:$0xff] %vm47, %v476
    %509 = vst.msk [vmem:[#allocation7 + $0x28] sm:$0xff] %vm47, %v477
    %510 = vst.msk [vmem:[#allocation7 + $0x30] sm:$0xff] %vm47, %v478
    %511 = vst.msk [vmem:[#allocation7 + $0x38] sm:$0xff] %vm47, %v479
    %512 = vst.msk [vmem:[#allocation7 + $0x40] sm:$0xff] %vm47, %v480
    %513 = vst.msk [vmem:[#allocation7 + $0x48] sm:$0xff] %vm47, %v481
    %514 = vst.msk [vmem:[#allocation7 + $0x50] sm:$0xff] %vm47, %v482
    %515 = vst.msk [vmem:[#allocation7 + $0x58] sm:$0xff] %vm47, %v483
    %516 = vst.msk [vmem:[#allocation7 + $0x60] sm:$0xff] %vm47, %v484
    %517 = vst.msk [vmem:[#allocation7 + $0x68] sm:$0xff] %vm47, %v485
    %518 = vst.msk [vmem:[#allocation7 + $0x70] sm:$0xff] %vm47, %v486
    %519 = vst.msk [vmem:[#allocation7 + $0x78] sm:$0xff] %vm47, %v487
    %vm520 = vmpackc.low %vm441, %vm440
    %vm521 = vmpackc.low %vm443, %vm442
    %vm522 = vmpackc.even %vm521, %vm520
    %vm523 = vmpackc.low %vm445, %vm444
    %vm524 = vmpackc.low %vm447, %vm446
    %vm525 = vmpackc.even %vm524, %vm523
    %vm526 = vmpackc.low %vm449, %vm448
    %vm527 = vmpackc.low %vm451, %vm450
    %vm528 = vmpackc.even %vm527, %vm526
    %vm529 = vmpackc.low %vm453, %vm452
    %vm530 = vmpackc.low %vm455, %vm454
    %vm531 = vmpackc.even %vm530, %vm529
    %v532 = vsel %vm522, 16843009, 0
    %v533 = vsel %vm525, 16843009, 0
    %v534 = vsel %vm528, 16843009, 0
    %v535 = vsel %vm531, 16843009, 0
    %v536 = vunpack.c.0.s8 %v532
    %v537 = vunpack.c.1.s8 %v532
    %v538 = vunpack.c.2.s8 %v532
    %v539 = vunpack.c.3.s8 %v532
    %v540 = vunpack.c.0.s8 %v533
    %v541 = vunpack.c.1.s8 %v533
    %v542 = vunpack.c.2.s8 %v533
    %v543 = vunpack.c.3.s8 %v533
    %v544 = vunpack.c.0.s8 %v534
    %v545 = vunpack.c.1.s8 %v534
    %v546 = vunpack.c.2.s8 %v534
    %v547 = vunpack.c.3.s8 %v534
    %v548 = vunpack.c.0.s8 %v535
    %v549 = vunpack.c.1.s8 %v535
    %v550 = vunpack.c.2.s8 %v535
    %v551 = vunpack.c.3.s8 %v535
    %v552 = vpack.c.b16 %v536, %v536
    %v553 = vpack.c.b8 %v552, %v552
    %v554 = vpack.c.b16 %v537, %v537
    %v555 = vpack.c.b8 %v554, %v554
    %v556 = vpack.c.b16 %v538, %v538
    %v557 = vpack.c.b8 %v556, %v556
    %v558 = vpack.c.b16 %v539, %v539
    %v559 = vpack.c.b8 %v558, %v558
    %v560 = vpack.c.b16 %v540, %v540
    %v561 = vpack.c.b8 %v560, %v560
    %v562 = vpack.c.b16 %v541, %v541
    %v563 = vpack.c.b8 %v562, %v562
    %v564 = vpack.c.b16 %v542, %v542
    %v565 = vpack.c.b8 %v564, %v564
    %v566 = vpack.c.b16 %v543, %v543
    %v567 = vpack.c.b8 %v566, %v566
    %v568 = vpack.c.b16 %v544, %v544
    %v569 = vpack.c.b8 %v568, %v568
    %v570 = vpack.c.b16 %v545, %v545
    %v571 = vpack.c.b8 %v570, %v570
    %v572 = vpack.c.b16 %v546, %v546
    %v573 = vpack.c.b8 %v572, %v572
    %v574 = vpack.c.b16 %v547, %v547
    %v575 = vpack.c.b8 %v574, %v574
    %v576 = vpack.c.b16 %v548, %v548
    %v577 = vpack.c.b8 %v576, %v576
    %v578 = vpack.c.b16 %v549, %v549
    %v579 = vpack.c.b8 %v578, %v578
    %v580 = vpack.c.b16 %v550, %v550
    %v581 = vpack.c.b8 %v580, %v580
    %v582 = vpack.c.b16 %v551, %v551
    %v583 = vpack.c.b8 %v582, %v582
    %vm584 = vcmask 123904
    %585 = vst.msk [vmem:[%s3] sm:$0x3] %vm584, %v553
    %586 = vst.msk [vmem:[%s3 + $0x2] sm:$0x3] %vm584, %v555
    %587 = vst.msk [vmem:[%s3 + $0x4] sm:$0x3] %vm584, %v557
    %588 = vst.msk [vmem:[%s3 + $0x6] sm:$0x3] %vm584, %v559
    %589 = vst.msk [vmem:[%s3 + $0x8] sm:$0x3] %vm584, %v561
    %590 = vst.msk [vmem:[%s3 + $0xa] sm:$0x3] %vm584, %v563
    %591 = vst.msk [vmem:[%s3 + $0xc] sm:$0x3] %vm584, %v565
    %592 = vst.msk [vmem:[%s3 + $0xe] sm:$0x3] %vm584, %v567
    %593 = vst.msk [vmem:[%s3 + $0x10] sm:$0x3] %vm584, %v569
    %594 = vst.msk [vmem:[%s3 + $0x12] sm:$0x3] %vm584, %v571
    %595 = vst.msk [vmem:[%s3 + $0x14] sm:$0x3] %vm584, %v573
    %596 = vst.msk [vmem:[%s3 + $0x16] sm:$0x3] %vm584, %v575
    %597 = vst.msk [vmem:[%s3 + $0x18] sm:$0x3] %vm584, %v577
    %598 = vst.msk [vmem:[%s3 + $0x1a] sm:$0x3] %vm584, %v579
    %599 = vst.msk [vmem:[%s3 + $0x1c] sm:$0x3] %vm584, %v581
    %600 = vst.msk [vmem:[%s3 + $0x1e] sm:$0x3] %vm584, %v583
    // Predicated region
    $region10: #{softmax_dropout_forward.1} parent=1 // pred_check
      _
    $region11: #{softmax_dropout_forward.1} parent=1 // pred_check_branch
      %602 = sbr.rel (0) target = $region13
    $region12: #{softmax_dropout_forward.1} parent=1 // pred_region
      %s604 = ssub.s32 2048, 2048
      %605 = vsyncadd [#allocation6], %s604
      %s606 = sshll.u32 [#allocation7], 4
      %s607 = int_to_ptr.vmem [resolvable:$true] %s606
      %612 = dma.vmem_to_hbm [thread:$0]  %s607, 2048, %s2, [#allocation6], 128, 128, 8
    $region13: #{softmax_dropout_forward.1} parent=1 // pred_fallthru
      _
    // Predicated region
    $region14: #{softmax_dropout_forward.1} parent=1 // pred_check
      _
    $region15: #{softmax_dropout_forward.1} parent=1 // pred_check_branch
      %614 = sbr.rel (0) target = $region17
    $region16: #{softmax_dropout_forward.1} parent=1 // pred_region
      _
    $region17: #{softmax_dropout_forward.1} parent=1 // pred_fallthru
      _
    // Predicated region
    $region18: #{softmax_dropout_forward.1} parent=1 // pred_check
      _
    $region19: #{softmax_dropout_forward.1} parent=1 // pred_check_branch
      %616 = sbr.rel (0) target = $region21
    $region20: #{softmax_dropout_forward.1} parent=1 // pred_region
      %s618 = ssub.s32 2048, 2048
      %619 = vsyncadd [#allocation9], %s618
      %s620 = sshll.u32 [#allocation8], 4
      %s621 = int_to_ptr.vmem [resolvable:$true] %s620
      %626 = dma.vmem_to_hbm [thread:$0]  %s621, 2048, %s4, [#allocation9], 128, 128, 8
    $region21: #{softmax_dropout_forward.1} parent=1 // pred_fallthru
      _
    // Predicated region
    $region22: #{softmax_dropout_forward.1} parent=1 // pred_check
      _
    $region23: #{softmax_dropout_forward.1} parent=1 // pred_check_branch
      %628 = sbr.rel (0) target = $region25
    $region24: #{softmax_dropout_forward.1} parent=1 // pred_region
      %629 = dma.done [#allocation6], 2048
    $region25: #{softmax_dropout_forward.1} parent=1 // pred_fallthru
      _
    // Predicated region
    $region26: #{softmax_dropout_forward.1} parent=1 // pred_check
      _
    $region27: #{softmax_dropout_forward.1} parent=1 // pred_check_branch
      %631 = sbr.rel (0) target = $region29
    $region28: #{softmax_dropout_forward.1} parent=1 // pred_region
      _
    $region29: #{softmax_dropout_forward.1} parent=1 // pred_fallthru
      _
    // Predicated region
    $region30: #{softmax_dropout_forward.1} parent=1 // pred_check
      _
    $region31: #{softmax_dropout_forward.1} parent=1 // pred_check_branch
      %633 = sbr.rel (0) target = $region33
    $region32: #{softmax_dropout_forward.1} parent=1 // pred_region
      %634 = dma.done [#allocation9], 2048
    $region33: #{softmax_dropout_forward.1} parent=1 // pred_fallthru
      _
    %635 = vsyncpa [#allocation5], 1
    %636 = vsyncpa [#allocation6], 1
    %637 = vsyncpa [#allocation9], 1

</llo_original>
